<compile_context>
chip_gen: v5e
topology: v5e:2x2
jax: 0.10.0
libtpu: 0.0.40
codegen_flags: <defaults>
</compile_context>

<pallas_src>
import jax
import jax.numpy as jnp
from jax.experimental import pallas as pl
from jax.experimental.pallas import tpu as pltpu


def _vmem_capacity_bytes():
    """Physical VMEM per TensorCore; falls back to 128 MiB (v5e/v6e)."""
    try:
        info = pltpu.get_tpu_info()
        cap = getattr(info, "vmem_capacity_bytes", None)
        if cap:
            return int(cap)
    except Exception:
        pass
    return 128 << 20


def _pick_spatial_tile(hw, n_batch, per_step_chans, itemsize, vmem_capacity):
    """Pick the spatial (lane) tile size.

    Candidates are 128-multiple divisors of hw (hw is pre-padded). Goals:
      * double-buffered working set within a generation-aware VMEM budget,
      * per-step HBM traffic near a generation-aware target (v7x amortizes the
        ~0.35us per-step overhead at ~3.2 TB/s, so it wants bigger steps),
      * enough grid steps (>= 8 total, >= 2 spatial) for pipelining/megacore.
    """
    divisors = [d for d in range(128, hw + 1, 128) if hw % d == 0]
    assert divisors, "hw must be a multiple of 128 (padded by the wrapper)"

    small_vmem = vmem_capacity <= (64 << 20)          # v7x: 64 MiB / TC
    vmem_budget = (20 << 20) if small_vmem else (48 << 20)
    target_step_bytes = (6 << 20) if small_vmem else (3 << 20)
    min_total_steps = 8

    def working_set(d):   # double-buffered in+out blocks
        return 2 * per_step_chans * d * itemsize

    def step_bytes(d):    # HBM traffic per grid step
        return per_step_chans * d * itemsize

    fitting = [d for d in divisors if working_set(d) <= vmem_budget]
    if not fitting:
        fitting = [min(divisors)]

    # Largest tile under the traffic target that still keeps the pipeline fed.
    good = [d for d in fitting
            if step_bytes(d) <= target_step_bytes
            and n_batch * (hw // d) >= min_total_steps]
    if good:
        return max(good)
    # Tiny problems: relax the step-count requirement but keep >= 2 spatial
    # steps when possible (megacore balance when N is 1 or odd).
    good = [d for d in fitting if step_bytes(d) <= target_step_bytes]
    if good:
        multi = [d for d in good if hw // d >= 2] or good
        return max(multi)
    # Everything exceeds the traffic target: smallest fitting tile.
    return min(fitting)


def _make_triangular_kernel(in_sizes, in_starts, out_ends):
    """refs = (in_0..in_{I-1}, out_0..out_{O-1}); blocks are (1, C, TS).

    The last output block holds the full channel concat: fill it with one
    store per input group, then produce every smaller output as an offset-0
    prefix copy of it (aligned, unmasked loads/stores).
    """
    n_in = len(in_sizes)
    n_out = len(out_ends)

    def kernel(*refs):
        in_refs = refs[:n_in]
        out_refs = refs[n_in:]
        last = out_refs[-1]
        # Build the full concat once (the only channel-offset stores).
        for j in range(n_in):
            last[:, pl.ds(in_starts[j], in_sizes[j]), :] = in_refs[j][...]
        # Every smaller output is an aligned prefix of the full concat.
        for ko in range(n_out - 1):
            out_refs[ko][...] = last[:, pl.ds(0, out_ends[ko]), :]

    return kernel


def triangular_forward(split_x):
    """split_x: ordered dict key -> (N, c_k, H, W) arrays.

    Returns dict key -> (N, end_k, H, W): the channel prefix up to and
    including group `key` (PyTorch SplitTensor.triang_view()).  Group order is
    the dict insertion order, matching SplitTensor.keys.
    """
    keys = list(split_x.keys())
    groups = [split_x[k] for k in keys]
    group_sizes = [int(g.shape[1]) for g in groups]
    N, _, H, W = groups[0].shape
    dtype = groups[0].dtype
    itemsize = jnp.dtype(dtype).itemsize

    starts, ends = [], []
    acc = 0
    for c in group_sizes:
        starts.append(acc)
        acc += c
        ends.append(acc)
    total = acc

    # Group 0's prefix is the group itself: pure identity, no kernel work.
    out = {keys[0]: groups[0]}
    if len(keys) == 1:
        return {k: out[k] for k in keys}
    if total == 0:  # degenerate: every group is empty
        for k in keys[1:]:
            out[k] = jnp.zeros((N, 0, H, W), dtype)
        return {k: out[k] for k in keys}

    # Lane-dense layout: fold spatial dims; pad to a 128-lane multiple so all
    # stores are unmasked and the block never blows the v7x VMEM budget.
    hw = H * W
    hw_pad = ((hw + 127) // 128) * 128

    # Zero-channel groups contribute nothing: skip them as kernel inputs
    # (a 0-sized BlockSpec dim would fail to lower).
    kin_sizes = [c for c in group_sizes if c > 0]
    kin_starts = [s for s, c in zip(starts, group_sizes) if c > 0]
    kin_arrays = [g for g, c in zip(groups, group_sizes) if c > 0]

    # Outputs produced by the kernel: groups 1.. with a non-empty prefix.
    kout_keys = [k for k, e in zip(keys[1:], ends[1:]) if e > 0]
    kout_ends = [e for e in ends[1:] if e > 0]
    for k, e in zip(keys[1:], ends[1:]):
        if e == 0:
            out[k] = jnp.zeros((N, 0, H, W), dtype)

    flat = []
    for g, c in zip(kin_arrays, kin_sizes):
        f = g.reshape(N, c, hw)
        if hw_pad != hw:
            f = jnp.pad(f, ((0, 0), (0, 0), (0, hw_pad - hw)))
        flat.append(f)

    per_step_chans = sum(kin_sizes) + sum(kout_ends)
    vmem_cap = _vmem_capacity_bytes()
    ts = _pick_spatial_tile(hw_pad, N, per_step_chans, itemsize, vmem_cap)
    grid = (N, hw_pad // ts)

    kernel = _make_triangular_kernel(kin_sizes, kin_starts, kout_ends)

    in_specs = [
        pl.BlockSpec((1, c, ts), lambda i, t: (i, 0, t)) for c in kin_sizes
    ]
    out_specs = [
        pl.BlockSpec((1, e, ts), lambda i, t: (i, 0, t)) for e in kout_ends
    ]
    out_shapes = tuple(
        jax.ShapeDtypeStruct((N, e, hw_pad), dtype) for e in kout_ends
    )

    bytes_accessed = itemsize * N * hw_pad * per_step_chans
    required_vmem = 2 * per_step_chans * ts * itemsize
    # Generation-aware cap: never request the whole 64 MiB on v7x.
    vmem_cap_limit = (48 << 20) if vmem_cap <= (64 << 20) else (96 << 20)
    vmem_limit = int(min(vmem_cap_limit, max(32 << 20, required_vmem + (4 << 20))))

    outs = pl.pallas_call(
        kernel,
        grid=grid,
        in_specs=in_specs,
        out_specs=out_specs,
        out_shape=out_shapes,
        compiler_params=pltpu.CompilerParams(
            dimension_semantics=("parallel", "parallel"),
            vmem_limit_bytes=vmem_limit,
        ),
        cost_estimate=pl.CostEstimate(
            flops=0, transcendentals=0, bytes_accessed=bytes_accessed
        ),
    )(*flat)

    for key, e, o in zip(kout_keys, kout_ends, outs):
        if hw_pad != hw:
            o = o[:, :, :hw]
        out[key] = o.reshape(N, e, H, W)
    return {k: out[k] for k in keys}


if __name__ == "__main__":
    # Small deterministic example: batch=2, spatial=16x16,
    # groups {'a': 2, 'b': 3, 'c': 3} -> output groups {'a': 2, 'b': 5, 'c': 8}.
    key = jax.random.PRNGKey(0)
    group_sizes = {"a": 2, "b": 3, "c": 3}
    N, H, W = 2, 16, 16

    split_x = {}
    for g_key, c in group_sizes.items():
        key, sub = jax.random.split(key)
        split_x[g_key] = jax.random.normal(sub, (N, c, H, W), dtype=jnp.float32)

    out = triangular_forward(split_x)
    out = {k: jax.block_until_ready(v) for k, v in out.items()}

    # Pure-JAX reference of SplitTensor.triang_view(): bitwise-exact copy.
    full = jnp.concatenate([split_x[k] for k in group_sizes], axis=1)
    end = 0
    for g_key, c in group_sizes.items():
        end += c
        ref = full[:, :end]
        assert out[g_key].shape == ref.shape, (out[g_key].shape, ref.shape)
        assert bool(jnp.array_equal(out[g_key], ref)), f"mismatch for group {g_key}"

    print("KERNEL_OK")
</pallas_src>

<mosaic_0001>
module attributes {stable_mosaic.version = 11 : i64} {
  func.func @kernel(%arg0: i32, %arg1: i32, %arg2: memref<1x2x128xf32, #tpu.memory_space<vmem>>, %arg3: memref<1x3x128xf32, #tpu.memory_space<vmem>>, %arg4: memref<1x3x128xf32, #tpu.memory_space<vmem>>, %arg5: memref<1x5x128xf32, #tpu.memory_space<vmem>>, %arg6: memref<1x8x128xf32, #tpu.memory_space<vmem>>) attributes {dimension_semantics = [#tpu.dimension_semantics<parallel>, #tpu.dimension_semantics<parallel>], iteration_bounds = array<i64: 2, 2>, scalar_prefetch = 0 : i64, scratch_operands = 0 : i64, tpu.core_type = #tpu.core_type<tc>, window_params = [{transform_indices = @transform_0, window_bounds = array<i64: 1, 2, 128>}, {transform_indices = @transform_1, window_bounds = array<i64: 1, 3, 128>}, {transform_indices = @transform_2, window_bounds = array<i64: 1, 3, 128>}, {transform_indices = @transform_3, window_bounds = array<i64: 1, 5, 128>}, {transform_indices = @transform_4, window_bounds = array<i64: 1, 8, 128>}]} {
    %c0 = arith.constant 0 : index
    %c0_0 = arith.constant 0 : index
    %c0_1 = arith.constant 0 : index
    %0 = vector.load %arg2[%c0, %c0_0, %c0_1] : memref<1x2x128xf32, #tpu.memory_space<vmem>>, vector<1x2x128xf32>
    %c0_2 = arith.constant 0 : index
    %c0_3 = arith.constant 0 : index
    %c0_4 = arith.constant 0 : index
    %1 = vector.load %arg6[%c0_2, %c0_3, %c0_4] : memref<1x8x128xf32, #tpu.memory_space<vmem>>, vector<1x2x128xf32>
    tpu.vector_store %arg6[%c0_2, %c0_3, %c0_4], %0 {strides = array<i32>} : memref<1x8x128xf32, #tpu.memory_space<vmem>>, vector<1x2x128xf32>,
    %c0_5 = arith.constant 0 : index
    %c0_6 = arith.constant 0 : index
    %c0_7 = arith.constant 0 : index
    %2 = vector.load %arg3[%c0_5, %c0_6, %c0_7] : memref<1x3x128xf32, #tpu.memory_space<vmem>>, vector<1x3x128xf32>
    %c0_8 = arith.constant 0 : index
    %c2 = arith.constant 2 : index
    %c0_9 = arith.constant 0 : index
    %3 = vector.load %arg6[%c0_8, %c2, %c0_9] : memref<1x8x128xf32, #tpu.memory_space<vmem>>, vector<1x3x128xf32>
    tpu.vector_store %arg6[%c0_8, %c2, %c0_9], %2 {strides = array<i32>} : memref<1x8x128xf32, #tpu.memory_space<vmem>>, vector<1x3x128xf32>,
    %c0_10 = arith.constant 0 : index
    %c0_11 = arith.constant 0 : index
    %c0_12 = arith.constant 0 : index
    %4 = vector.load %arg4[%c0_10, %c0_11, %c0_12] : memref<1x3x128xf32, #tpu.memory_space<vmem>>, vector<1x3x128xf32>
    %c0_13 = arith.constant 0 : index
    %c5 = arith.constant 5 : index
    %c0_14 = arith.constant 0 : index
    %5 = vector.load %arg6[%c0_13, %c5, %c0_14] : memref<1x8x128xf32, #tpu.memory_space<vmem>>, vector<1x3x128xf32>
    tpu.vector_store %arg6[%c0_13, %c5, %c0_14], %4 {strides = array<i32>} : memref<1x8x128xf32, #tpu.memory_space<vmem>>, vector<1x3x128xf32>,
    %c0_15 = arith.constant 0 : index
    %c0_16 = arith.constant 0 : index
    %c0_17 = arith.constant 0 : index
    %6 = vector.load %arg6[%c0_15, %c0_16, %c0_17] : memref<1x8x128xf32, #tpu.memory_space<vmem>>, vector<1x5x128xf32>
    %c0_18 = arith.constant 0 : index
    %c0_19 = arith.constant 0 : index
    %c0_20 = arith.constant 0 : index
    %7 = vector.load %arg5[%c0_18, %c0_19, %c0_20] : memref<1x5x128xf32, #tpu.memory_space<vmem>>, vector<1x5x128xf32>
    tpu.vector_store %arg5[%c0_18, %c0_19, %c0_20], %6 {strides = array<i32>} : memref<1x5x128xf32, #tpu.memory_space<vmem>>, vector<1x5x128xf32>,
    return
  }
  func.func @transform_0(%arg0: i32, %arg1: i32) -> (i32, i32, i32) {
    %c0_i32 = arith.constant 0 : i32
    %c0_i32_0 = arith.constant 0 : i32
    return %arg0, %c0_i32, %arg1 : i32, i32, i32
  }
  func.func @transform_1(%arg0: i32, %arg1: i32) -> (i32, i32, i32) {
    %c0_i32 = arith.constant 0 : i32
    %c0_i32_0 = arith.constant 0 : i32
    return %arg0, %c0_i32, %arg1 : i32, i32, i32
  }
  func.func @transform_2(%arg0: i32, %arg1: i32) -> (i32, i32, i32) {
    %c0_i32 = arith.constant 0 : i32
    %c0_i32_0 = arith.constant 0 : i32
    return %arg0, %c0_i32, %arg1 : i32, i32, i32
  }
  func.func @transform_3(%arg0: i32, %arg1: i32) -> (i32, i32, i32) {
    %c0_i32 = arith.constant 0 : i32
    %c0_i32_0 = arith.constant 0 : i32
    return %arg0, %c0_i32, %arg1 : i32, i32, i32
  }
  func.func @transform_4(%arg0: i32, %arg1: i32) -> (i32, i32, i32) {
    %c0_i32 = arith.constant 0 : i32
    %c0_i32_0 = arith.constant 0 : i32
    return %arg0, %c0_i32, %arg1 : i32, i32, i32
  }
}

</mosaic_0001>

<llo_original>
// kernel: tpu_custom_call.1
$region0: #{tpu_custom_call.1}
  #allocation0 [shape = 'u32[]', space=smem, size = 0x4, offset = 0x4, fixed_abs, tag = 'smem constant byte address 0x4 - core index']
  #allocation1 [shape = 'u32[72,128]{1,0:T(1,128)}', space=vmem, size = 0x9000, scoped, tag = 'internal scratch']
  %s0 = inlined_call_operand.vmem [shape: f32[2,2,256], index: 0, kind: input, shape index: {}]
  %s1 = inlined_call_operand.vmem [shape: f32[2,3,256], index: 1, kind: input, shape index: {}]
  %s2 = inlined_call_operand.vmem [shape: f32[2,3,256], index: 2, kind: input, shape index: {}]
  %s3 = inlined_call_operand.vmem [shape: f32[2,5,256], index: 3, kind: output, shape index: {0}]
  %s4 = inlined_call_operand.hbm [shape: f32[2,8,256], index: 4, kind: output, shape index: {1}]
  %5 = xla_tuple %s3, %s4
  %s6 = sld [smem:[#allocation0]]
  $region53: #{tpu_custom_call.1} parent=0
    _
  %s8 = ssub.s32 1, %s6
  %s9 = scalar_select 0, %s8, %s6
  $region1: #{tpu_custom_call.1} parent=0
    #allocation2 [shape = 'u8[8192]{0}', space=vmem, size = 0x2000, scoped, tag = 'output window, operand 1']
    #allocation3 [shape = 's32[2]{0}', space=sflag, size = 0x8, scoped, tag = 'scoped memory for tpu_custom_call.1']
    %10 = vsyncpa [#allocation3], 0
    %s11 = scalar_lea.sflag [#allocation3], 1
    %12 = vsyncpa %s11, 0
    loop: start=0, step=1, limit=6
    $region2: #{tpu_custom_call.1} parent=1 // loop_pre_header
      _
    $region3: #{tpu_custom_call.1} parent=1 // loop_header
      %s14 = sphi 0, %s18
      %p15 = scmp.ge.s32.totalorder %s14, 6
      %s21 = sphi 0, %s33
      %s22 = sphi 0, %s29
      %s23 = sphi 0, %s21
      %s24 = sphi 0, %s22
      %s25 = sphi 0, %s23
      %s26 = sphi 0, %s24
      %s38 = sphi 0, %s40
      %s41 = sphi 0, %s38
      %s42 = sphi 0, %s41
      %s58 = sphi 0, %s42
      %s66 = sphi 0, %s68
      %s69 = sphi 0, %s66
      %s70 = sphi 0, %s69
      %s86 = sphi 0, %s70
      %s94 = sphi 0, %s96
      %s97 = sphi 0, %s94
      %s98 = sphi 0, %s97
      %s114 = sphi 0, %s98
      %s122 = sphi 0, %s124
      %s125 = sphi 0, %s122
      %s126 = sphi 0, %s125
      %s142 = sphi 0, %s126
      %s150 = sphi 0, %s152
      %s153 = sphi 0, %s150
      %s154 = sphi 0, %s153
      %s170 = sphi 0, %s154
    $region4: #{tpu_custom_call.1} parent=1 // loop_header_branch
      %17 = sbr.rel (%p15) target = $region8
    $region5: #{tpu_custom_call.1} parent=1 // loop_body
      %s19 = ssub.s32 %s14, 1
      %s20 = ssub.s32 %s14, 2
      %s27 = sadd.s32 1, %s22
      %p28 = scmp.ge.s32.totalorder %s27, 2
      %s29 = scalar_select %p28, 0, %s27
      %s30 = sadd.s32 1, %s21
      %s31 = scalar_select %p28, %s30, %s21
      %p32 = scmp.ge.s32.totalorder %s31, 2
      %s33 = scalar_select %p32, 0, %s31
      %s34 = ssub.s32 %s21, %s33
      %s35 = ssub.s32 %s22, %s29
      %s36 = sor.u32 %s34, %s35
      %p37 = scmp.eq.s32.totalorder %s36, 0
      %s39 = sadd.s32 %s38, 1
      %s40 = scalar_select %p37, %s38, %s39
      %p43 = pneg %p37
      %p44 = scmp.eq.s32.totalorder %s14, 3
      %p45 = por %p43, %p44
      %p46 = scmp.ne.s32.totalorder %s38, %s41
      %p47 = scmp.eq.s32.totalorder %s14, 0
      %p48 = por %p46, %p47
      %p49 = scmp.ne.s32.totalorder %s38, %s41
      %p50 = scmp.eq.s32.totalorder %s19, 3
      %p51 = por %p49, %p50
      %p52 = scmp.ne.s32.totalorder %s41, %s42
      %p53 = scmp.eq.s32.totalorder %s19, 0
      %p54 = por %p52, %p53
      %p55 = scmp.ne.s32.totalorder %s41, %s42
      %p56 = scmp.eq.s32.totalorder %s20, 3
      %p57 = por %p55, %p56
      %p59 = scmp.ne.s32.totalorder %s42, %s58
      %p60 = scmp.eq.s32.totalorder %s20, 0
      %p61 = por %p59, %p60
      %s62 = ssub.s32 %s21, %s33
      %s63 = ssub.s32 %s22, %s29
      %s64 = sor.u32 %s62, %s63
      %p65 = scmp.eq.s32.totalorder %s64, 0
      %s67 = sadd.s32 %s66, 1
      %s68 = scalar_select %p65, %s66, %s67
      %p71 = pneg %p65
      %p72 = scmp.eq.s32.totalorder %s14, 3
      %p73 = por %p71, %p72
      %p74 = scmp.ne.s32.totalorder %s66, %s69
      %p75 = scmp.eq.s32.totalorder %s14, 0
      %p76 = por %p74, %p75
      %p77 = scmp.ne.s32.totalorder %s66, %s69
      %p78 = scmp.eq.s32.totalorder %s19, 3
      %p79 = por %p77, %p78
      %p80 = scmp.ne.s32.totalorder %s69, %s70
      %p81 = scmp.eq.s32.totalorder %s19, 0
      %p82 = por %p80, %p81
      %p83 = scmp.ne.s32.totalorder %s69, %s70
      %p84 = scmp.eq.s32.totalorder %s20, 3
      %p85 = por %p83, %p84
      %p87 = scmp.ne.s32.totalorder %s70, %s86
      %p88 = scmp.eq.s32.totalorder %s20, 0
      %p89 = por %p87, %p88
      %s90 = ssub.s32 %s21, %s33
      %s91 = ssub.s32 %s22, %s29
      %s92 = sor.u32 %s90, %s91
      %p93 = scmp.eq.s32.totalorder %s92, 0
      %s95 = sadd.s32 %s94, 1
      %s96 = scalar_select %p93, %s94, %s95
      %p99 = pneg %p93
      %p100 = scmp.eq.s32.totalorder %s14, 3
      %p101 = por %p99, %p100
      %p102 = scmp.ne.s32.totalorder %s94, %s97
      %p103 = scmp.eq.s32.totalorder %s14, 0
      %p104 = por %p102, %p103
      %p105 = scmp.ne.s32.totalorder %s94, %s97
      %p106 = scmp.eq.s32.totalorder %s19, 3
      %p107 = por %p105, %p106
      %p108 = scmp.ne.s32.totalorder %s97, %s98
      %p109 = scmp.eq.s32.totalorder %s19, 0
      %p110 = por %p108, %p109
      %p111 = scmp.ne.s32.totalorder %s97, %s98
      %p112 = scmp.eq.s32.totalorder %s20, 3
      %p113 = por %p111, %p112
      %p115 = scmp.ne.s32.totalorder %s98, %s114
      %p116 = scmp.eq.s32.totalorder %s20, 0
      %p117 = por %p115, %p116
      %s118 = ssub.s32 %s21, %s33
      %s119 = ssub.s32 %s22, %s29
      %s120 = sor.u32 %s118, %s119
      %p121 = scmp.eq.s32.totalorder %s120, 0
      %s123 = sadd.s32 %s122, 1
      %s124 = scalar_select %p121, %s122, %s123
      %p127 = pneg %p121
      %p128 = scmp.eq.s32.totalorder %s14, 3
      %p129 = por %p127, %p128
      %p130 = scmp.ne.s32.totalorder %s122, %s125
      %p131 = scmp.eq.s32.totalorder %s14, 0
      %p132 = por %p130, %p131
      %p133 = scmp.ne.s32.totalorder %s122, %s125
      %p134 = scmp.eq.s32.totalorder %s19, 3
      %p135 = por %p133, %p134
      %p136 = scmp.ne.s32.totalorder %s125, %s126
      %p137 = scmp.eq.s32.totalorder %s19, 0
      %p138 = por %p136, %p137
      %p139 = scmp.ne.s32.totalorder %s125, %s126
      %p140 = scmp.eq.s32.totalorder %s20, 3
      %p141 = por %p139, %p140
      %p143 = scmp.ne.s32.totalorder %s126, %s142
      %p144 = scmp.eq.s32.totalorder %s20, 0
      %p145 = por %p143, %p144
      %s146 = ssub.s32 %s21, %s33
      %s147 = ssub.s32 %s22, %s29
      %s148 = sor.u32 %s146, %s147
      %p149 = scmp.eq.s32.totalorder %s148, 0
      %s151 = sadd.s32 %s150, 1
      %s152 = scalar_select %p149, %s150, %s151
      %p155 = pneg %p149
      %p156 = scmp.eq.s32.totalorder %s14, 3
      %p157 = por %p155, %p156
      %p158 = scmp.ne.s32.totalorder %s150, %s153
      %p159 = scmp.eq.s32.totalorder %s14, 0
      %p160 = por %p158, %p159
      %p161 = scmp.ne.s32.totalorder %s150, %s153
      %p162 = scmp.eq.s32.totalorder %s19, 3
      %p163 = por %p161, %p162
      %p164 = scmp.ne.s32.totalorder %s153, %s154
      %p165 = scmp.eq.s32.totalorder %s19, 0
      %p166 = por %p164, %p165
      %p167 = scmp.ne.s32.totalorder %s153, %s154
      %p168 = scmp.eq.s32.totalorder %s20, 3
      %p169 = por %p167, %p168
      %p171 = scmp.ne.s32.totalorder %s154, %s170
      %p172 = scmp.eq.s32.totalorder %s20, 0
      %p173 = por %p171, %p172
      %p174 = scmp.le.s32.totalorder 1, %s14
      %p175 = scmp.lt.s32.totalorder %s14, 5
      %p176 = pnand %p174, %p175
      %p177 = pneg %p176
      // Predicated region
      $region9: #{tpu_custom_call.1} parent=5 // pred_check
        _
      $region10: #{tpu_custom_call.1} parent=5 // pred_check_branch
        %179 = sbr.rel (%p176) target = $region12
      $region11: #{tpu_custom_call.1} parent=5 // pred_region
        %s180 = ssub.s32 %s14, 1
      $region12: #{tpu_custom_call.1} parent=5 // pred_fallthru
        _
      %p181 = scmp.lt.s32.totalorder %s14, 4
      // Predicated region
      $region13: #{tpu_custom_call.1} parent=5 // pred_check
        %p182 = pneg %p181
      $region14: #{tpu_custom_call.1} parent=5 // pred_check_branch
        %184 = sbr.rel (%p182) target = $region16
      $region15: #{tpu_custom_call.1} parent=5 // pred_region
        // Predicated region
        $region17: #{tpu_custom_call.1} parent=15 // pred_check
          %p185 = pneg %p48
        $region18: #{tpu_custom_call.1} parent=15 // pred_check_branch
          %187 = sbr.rel (%p185) target = $region20
        $region19: #{tpu_custom_call.1} parent=15 // pred_region
          %p188 = scmp.lt.s32.totalorder %s21, 1
          %s189 = scalar_select %p188, %s21, 1
          %p190 = scmp.lt.s32.totalorder %s22, 1
          %s191 = scalar_select %p190, %s22, 1
          %s192 = smul.addr %s189, 2
          %s193 = sadd.s32 %s191, %s192
          %s194 = smul.addr %s193, 2
          %s195 = scalar_lea.vmem %s0, %s194
        $region20: #{tpu_custom_call.1} parent=15 // pred_fallthru
          _
        // Predicated region
        $region21: #{tpu_custom_call.1} parent=15 // pred_check
          %p196 = pneg %p76
        $region22: #{tpu_custom_call.1} parent=15 // pred_check_branch
          %198 = sbr.rel (%p196) target = $region24
        $region23: #{tpu_custom_call.1} parent=15 // pred_region
          %p199 = scmp.lt.s32.totalorder %s21, 1
          %s200 = scalar_select %p199, %s21, 1
          %p201 = scmp.lt.s32.totalorder %s22, 1
          %s202 = scalar_select %p201, %s22, 1
          %s203 = smul.addr %s200, 2
          %s204 = sadd.s32 %s202, %s203
          %s205 = smul.addr %s204, 4
          %s206 = scalar_lea.vmem %s1, %s205
        $region24: #{tpu_custom_call.1} parent=15 // pred_fallthru
          _
        // Predicated region
        $region25: #{tpu_custom_call.1} parent=15 // pred_check
          %p207 = pneg %p104
        $region26: #{tpu_custom_call.1} parent=15 // pred_check_branch
          %209 = sbr.rel (%p207) target = $region28
        $region27: #{tpu_custom_call.1} parent=15 // pred_region
          %p210 = scmp.lt.s32.totalorder %s21, 1
          %s211 = scalar_select %p210, %s21, 1
          %p212 = scmp.lt.s32.totalorder %s22, 1
          %s213 = scalar_select %p212, %s22, 1
          %s214 = smul.addr %s211, 2
          %s215 = sadd.s32 %s213, %s214
          %s216 = smul.addr %s215, 4
          %s217 = scalar_lea.vmem %s2, %s216
        $region28: #{tpu_custom_call.1} parent=15 // pred_fallthru
          _
      $region16: #{tpu_custom_call.1} parent=5 // pred_fallthru
        _
      %p218 = scmp.le.s32.totalorder 1, %s14
      %p219 = scmp.lt.s32.totalorder %s14, 5
      %p220 = pnand %p218, %p219
      %p221 = pneg %p220
      // Predicated region
      $region29: #{tpu_custom_call.1} parent=5 // pred_check
        _
      $region30: #{tpu_custom_call.1} parent=5 // pred_check_branch
        %223 = sbr.rel (%p220) target = $region32
      $region31: #{tpu_custom_call.1} parent=5 // pred_region
        %s224 = ssub.s32 %s14, 1
        %p225 = scmp.lt.s32.totalorder %s23, 1
        %s226 = scalar_select %p225, %s23, 1
        %p227 = scmp.lt.s32.totalorder %s24, 1
        %s228 = scalar_select %p227, %s24, 1
        %s229 = smul.addr %s226, 2
        %s230 = sadd.s32 %s228, %s229
        %s231 = smul.addr %s230, 2
        %s232 = scalar_lea.vmem %s0, %s231
        %p233 = pneg %p54
        %p234 = pneg %p51
        %p235 = scmp.lt.s32.totalorder %s23, 1
        %s236 = scalar_select %p235, %s23, 1
        %p237 = scmp.lt.s32.totalorder %s24, 1
        %s238 = scalar_select %p237, %s24, 1
        %s239 = smul.addr %s236, 2
        %s240 = sadd.s32 %s238, %s239
        %s241 = smul.addr %s240, 4
        %s242 = scalar_lea.vmem %s1, %s241
        %p243 = pneg %p82
        %p244 = pneg %p79
        %p245 = scmp.lt.s32.totalorder %s23, 1
        %s246 = scalar_select %p245, %s23, 1
        %p247 = scmp.lt.s32.totalorder %s24, 1
        %s248 = scalar_select %p247, %s24, 1
        %s249 = smul.addr %s246, 2
        %s250 = sadd.s32 %s248, %s249
        %s251 = smul.addr %s250, 4
        %s252 = scalar_lea.vmem %s2, %s251
        %p253 = pneg %p110
        %p254 = pneg %p107
        %p255 = pneg %p138
        %p256 = pneg %p135
        %p257 = scmp.lt.s32.totalorder %s23, 1
        %s258 = scalar_select %p257, %s23, 1
        %p259 = scmp.lt.s32.totalorder %s24, 1
        %s260 = scalar_select %p259, %s24, 1
        %s261 = smul.addr %s258, 2
        %s262 = sadd.s32 %s260, %s261
        %s263 = smul.addr %s262, 8
        %s264 = scalar_lea.vmem %s3, %s263
        %p265 = pneg %p166
        %p266 = pneg %p163
        %s267 = sand.u32 %s153, 1
        %s268 = scalar_lea.sflag [#allocation3], %s267
        %s269 = sand.u32 %s153, 1
        %s270 = smul.addr %s269, 8
        %s271 = scalar_lea.vmem [#allocation2], %s270
        %p272 = scmp.lt.s32.totalorder %s23, 1
        %s273 = scalar_select %p272, %s23, 1
        %p274 = scmp.lt.s32.totalorder %s24, 1
        %s275 = scalar_select %p274, %s24, 1
        %s276 = smul.addr %s273, 2
        %s277 = sadd.s32 %s275, %s276
        %s278 = smul.addr %s277, 2
        %s279 = scalar_lea.vmem %s0, %s278
        %p280 = scmp.lt.s32.totalorder %s23, 1
        %s281 = scalar_select %p280, %s23, 1
        %p282 = scmp.lt.s32.totalorder %s24, 1
        %s283 = scalar_select %p282, %s24, 1
        %s284 = smul.addr %s281, 2
        %s285 = sadd.s32 %s283, %s284
        %s286 = smul.addr %s285, 4
        %s287 = scalar_lea.vmem %s1, %s286
        %p288 = scmp.lt.s32.totalorder %s23, 1
        %s289 = scalar_select %p288, %s23, 1
        %p290 = scmp.lt.s32.totalorder %s24, 1
        %s291 = scalar_select %p290, %s24, 1
        %s292 = smul.addr %s289, 2
        %s293 = sadd.s32 %s291, %s292
        %s294 = smul.addr %s293, 4
        %s295 = scalar_lea.vmem %s2, %s294
        %p296 = scmp.lt.s32.totalorder %s23, 1
        %s297 = scalar_select %p296, %s23, 1
        %p298 = scmp.lt.s32.totalorder %s24, 1
        %s299 = scalar_select %p298, %s24, 1
        %s300 = smul.addr %s297, 2
        %s301 = sadd.s32 %s299, %s300
        %s302 = smul.addr %s301, 8
        %s303 = scalar_lea.vmem %s3, %s302
        %v304 = vld [vmem:[%s279] sm:$0x3]
        %305 = vst [vmem:[%s271] sm:$0x3] %v304
        %v306 = vld [vmem:[%s287] sm:$0x7]
        %307 = vst [vmem:[%s271 + $0x2] sm:$0x7] %v306
        %v308 = vld [vmem:[%s295] sm:$0x7]
        %309 = vst [vmem:[%s271 + $0x5] sm:$0x7] %v308
        %v310 = vld [vmem:[%s271] sm:$0x1f]
        %311 = vst [vmem:[%s303] sm:$0x1f] %v310
        %p312 = scmp.lt.s32.totalorder %s23, 1
        %s313 = scalar_select %p312, %s23, 1
        %p314 = scmp.lt.s32.totalorder %s24, 1
        %s315 = scalar_select %p314, %s24, 1
        %s316 = smul.addr %s313, 2
        %s317 = sadd.s32 %s315, %s316
        %s318 = smul.addr %s317, 8
        %s319 = scalar_lea.vmem %s3, %s318
        %s320 = sand.u32 %s153, 1
        %s321 = scalar_lea.sflag [#allocation3], %s320
        %s322 = sand.u32 %s153, 1
        %s323 = smul.addr %s322, 8
        %s324 = scalar_lea.vmem [#allocation2], %s323
        // Predicated region
        $region33: #{tpu_custom_call.1} parent=31 // pred_check
          %p325 = pneg %p135
        $region34: #{tpu_custom_call.1} parent=31 // pred_check_branch
          %327 = sbr.rel (%p325) target = $region36
        $region35: #{tpu_custom_call.1} parent=31 // pred_region
          _
        $region36: #{tpu_custom_call.1} parent=31 // pred_fallthru
          _
        // Predicated region
        $region37: #{tpu_custom_call.1} parent=31 // pred_check
          %p328 = pneg %p163
        $region38: #{tpu_custom_call.1} parent=31 // pred_check_branch
          %330 = sbr.rel (%p328) target = $region40
        $region39: #{tpu_custom_call.1} parent=31 // pred_region
          %332 = vsyncadd %s321, 0
          %s333 = smul.addr %s23, 2
          %s334 = sadd.s32 %s24, %s333
          %s335 = smul.addr %s334, 8
          %s336 = scalar_lea.hbm %s4, %s335
          %s338 = sshll.u32 %s324, 4
          %s339 = int_to_ptr.vmem [resolvable:$true] %s338
          %s340 = sshll.u32 %s336, 4
          %s341 = int_to_ptr.hbm [resolvable:$true] %s340
          %343 = dma.vmem_to_hbm [thread:$0]  %s339, 128, %s341, %s321
        $region40: #{tpu_custom_call.1} parent=31 // pred_fallthru
          _
      $region32: #{tpu_custom_call.1} parent=5 // pred_fallthru
        _
      %p344 = scmp.le.s32.totalorder 2, %s14
      // Predicated region
      $region41: #{tpu_custom_call.1} parent=5 // pred_check
        %p345 = pneg %p344
      $region42: #{tpu_custom_call.1} parent=5 // pred_check_branch
        %347 = sbr.rel (%p345) target = $region44
      $region43: #{tpu_custom_call.1} parent=5 // pred_region
        %s348 = ssub.s32 %s14, 2
        // Predicated region
        $region45: #{tpu_custom_call.1} parent=43 // pred_check
          %p349 = pneg %p141
        $region46: #{tpu_custom_call.1} parent=43 // pred_check_branch
          %351 = sbr.rel (%p349) target = $region48
        $region47: #{tpu_custom_call.1} parent=43 // pred_region
          %p352 = scmp.lt.s32.totalorder %s25, 1
          %s353 = scalar_select %p352, %s25, 1
          %p354 = scmp.lt.s32.totalorder %s26, 1
          %s355 = scalar_select %p354, %s26, 1
          %s356 = smul.addr %s353, 2
          %s357 = sadd.s32 %s355, %s356
          %s358 = smul.addr %s357, 8
          %s359 = scalar_lea.vmem %s3, %s358
        $region48: #{tpu_custom_call.1} parent=43 // pred_fallthru
          _
        // Predicated region
        $region49: #{tpu_custom_call.1} parent=43 // pred_check
          %p360 = pneg %p169
        $region50: #{tpu_custom_call.1} parent=43 // pred_check_branch
          %362 = sbr.rel (%p360) target = $region52
        $region51: #{tpu_custom_call.1} parent=43 // pred_region
          %s363 = sand.u32 %s154, 1
          %s364 = scalar_lea.sflag [#allocation3], %s363
          %s365 = sand.u32 %s154, 1
          %s366 = smul.addr %s365, 8
          %s367 = scalar_lea.vmem [#allocation2], %s366
          %369 = dma.done %s364, 128
        $region52: #{tpu_custom_call.1} parent=43 // pred_fallthru
          _
      $region44: #{tpu_custom_call.1} parent=5 // pred_fallthru
        _
    $region6: #{tpu_custom_call.1} parent=1 // loop_footer
      %s18 = sadd.s32 1, %s14
    $region7: #{tpu_custom_call.1} parent=1 // loop_footer_branch
      %13 = sbr.rel target = $region3
    $region8: #{tpu_custom_call.1} parent=1 // loop_exit
      _
    %370 = vsyncpa [#allocation3], 1
    %s371 = scalar_lea.sflag [#allocation3], 1
    %372 = vsyncpa %s371, 1

</llo_original>
